<compile_context>
chip_gen: v7x
topology: tpu7x:2x2x1
jax: 0.10.0
libtpu: 0.0.40
codegen_flags: <defaults>
</compile_context>

<pallas_src>
import jax
import jax.numpy as jnp
from jax.experimental import pallas as pl
from jax.experimental.pallas import tpu as pltpu

NPAR = 10          # input feature dim (nd)
HIDDEN = 200       # fc1 output dim (logical)
HIDDEN_PAD = 256   # lane-friendly padded hidden dim (zero-padded weights)
OUT = 1            # fc2 output dim


def _mlp_kernel_t(xT_ref, w1T_ref, b1_ref, w2T_ref, b2_ref, o_ref):
    # fc1 + tanh, feature-major:
    #   w1T (HIDDEN_PAD, NPAR) @ xT (NPAR, tile_b) -> h (HIDDEN_PAD, tile_b)
    h = jnp.dot(w1T_ref[...], xT_ref[...], preferred_element_type=jnp.float32)
    h = jnp.tanh(h + b1_ref[...])          # b1 is (HIDDEN_PAD, 1); broadcasts over lanes (EUP tanh)
    # fc2: w2T (1, HIDDEN_PAD) @ h -> (1, tile_b) lane-dense output row
    y = jnp.dot(w2T_ref[...], h, preferred_element_type=jnp.float32) + b2_ref[...]
    o_ref[...] = y.astype(o_ref.dtype)


def uq_net_mean_forward(x, w1, b1, w2, b2, *, tile_b=1024):
    """Forward pass of UQ_Net_mean: tanh(x @ w1 + b1) @ w2 + b2.

    x:  (N, NPAR) float32
    w1: (NPAR, HIDDEN), b1: (HIDDEN,)
    w2: (HIDDEN, OUT),  b2: (OUT,)
    returns: (N, OUT) float32
    """
    n = x.shape[0]
    # Effective lane tile: a multiple of 128, no larger than the 128-rounded batch.
    tb = min(tile_b, 128 * pl.cdiv(n, 128))
    tb = max(128, (tb // 128) * 128)
    n_pad = tb * pl.cdiv(n, tb)

    # Feature-major, zero-padded batch: (NPAR, n_pad). Padded columns are sliced
    # away after the kernel, so their (bias-only) outputs never escape.
    xT = jnp.zeros((NPAR, n_pad), jnp.float32).at[:, :n].set(x.T)

    # Pre-transposed, zero-padded weights. Padded hidden units see b1 = 0 and a
    # zero W2 row, so they contribute exactly 0 through fc2.
    w1T = jnp.zeros((HIDDEN_PAD, NPAR), jnp.float32).at[:HIDDEN, :].set(w1.T)
    b1p = jnp.zeros((HIDDEN_PAD, 1), jnp.float32).at[:HIDDEN, 0].set(b1)
    w2T = jnp.zeros((OUT, HIDDEN_PAD), jnp.float32).at[:, :HIDDEN].set(w2.T)
    b2p = b2.reshape(OUT, 1).astype(jnp.float32)

    grid = (n_pad // tb,)
    yT = pl.pallas_call(
        _mlp_kernel_t,
        out_shape=jax.ShapeDtypeStruct((OUT, n_pad), jnp.float32),
        grid_spec=pltpu.PrefetchScalarGridSpec(
            num_scalar_prefetch=0,
            grid=grid,
            in_specs=[
                pl.BlockSpec((NPAR, tb), lambda i: (0, i)),          # x tile (feature-major)
                pl.BlockSpec((HIDDEN_PAD, NPAR), lambda i: (0, 0)),  # W1^T (resident)
                pl.BlockSpec((HIDDEN_PAD, 1), lambda i: (0, 0)),     # b1   (resident)
                pl.BlockSpec((OUT, HIDDEN_PAD), lambda i: (0, 0)),   # W2^T (resident)
                pl.BlockSpec((OUT, 1), lambda i: (0, 0)),            # b2   (resident)
            ],
            out_specs=pl.BlockSpec((OUT, tb), lambda i: (0, i)),     # lane-dense output
        ),
        compiler_params=pltpu.CompilerParams(
            dimension_semantics=("parallel",),   # lets v7x shard batch tiles over its 2 TCs
        ),
    )(xT, w1T, b1p, w2T, b2p)

    # Drop batch padding and return (N, OUT) to match the PyTorch layout.
    return yT[:, :n].T


def init_params(key):
    """Deterministic init mimicking nn.Linear default (uniform +/- 1/sqrt(fan_in))."""
    k1, k2, k3, k4 = jax.random.split(key, 4)
    bound1 = 1.0 / jnp.sqrt(float(NPAR))
    bound2 = 1.0 / jnp.sqrt(float(HIDDEN))
    w1 = jax.random.uniform(k1, (NPAR, HIDDEN), jnp.float32, -bound1, bound1)
    b1 = jax.random.uniform(k2, (HIDDEN,), jnp.float32, -bound1, bound1)
    w2 = jax.random.uniform(k3, (HIDDEN, OUT), jnp.float32, -bound2, bound2)
    b2 = jax.random.uniform(k4, (OUT,), jnp.float32, -bound2, bound2)
    return w1, b1, w2, b2


if __name__ == "__main__":
    key = jax.random.PRNGKey(0)
    k_params, k_train, k_valid = jax.random.split(key, 3)

    w1, b1, w2, b2 = init_params(k_params)

    # Small-shape analog of the script's data prep (glue in plain JAX).
    # Nvalid=250 is deliberately NOT a multiple of 128 to exercise the ragged tail.
    Ntrain, Nvalid = 512, 250
    xtrain = jax.random.normal(k_train, (Ntrain, NPAR), jnp.float32) * 1.0
    x_mean = jnp.mean(xtrain, axis=0)
    x_std = jnp.std(xtrain, axis=0, ddof=1)   # torch.std uses Bessel's correction
    xvalid = jax.random.normal(k_valid, (Nvalid, NPAR), jnp.float32) + 2.0
    xvalid_normal = (xvalid - x_mean) / x_std

    out = uq_net_mean_forward(xvalid_normal, w1, b1, w2, b2)
    out = jax.block_until_ready(out)

    # Reference check against plain-JAX forward.
    ref = jnp.tanh(xvalid_normal @ w1 + b1) @ w2 + b2
    assert out.shape == (Nvalid, OUT)
    assert jnp.allclose(out, ref, atol=1e-5, rtol=1e-5)

    # Second check: force a multi-tile grid (grid=3) to exercise index_map i>0.
    x_big = jax.random.normal(jax.random.PRNGKey(1), (300, NPAR), jnp.float32)
    out2 = jax.block_until_ready(
        uq_net_mean_forward(x_big, w1, b1, w2, b2, tile_b=128))
    ref2 = jnp.tanh(x_big @ w1 + b1) @ w2 + b2
    assert out2.shape == (300, OUT)
    assert jnp.allclose(out2, ref2, atol=1e-5, rtol=1e-5)

    print("KERNEL_OK")
</pallas_src>

<mosaic_0001>
module attributes {stable_mosaic.version = 11 : i64} {
  func.func @_mlp_kernel_t(%arg0: i32, %arg1: memref<10x256xf32, #tpu.memory_space<vmem>>, %arg2: memref<256x10xf32, #tpu.memory_space<vmem>>, %arg3: memref<256x1xf32, #tpu.memory_space<vmem>>, %arg4: memref<1x256xf32, #tpu.memory_space<vmem>>, %arg5: memref<1x1xf32, #tpu.memory_space<vmem>>, %arg6: memref<1x256xf32, #tpu.memory_space<vmem>>) attributes {dimension_semantics = [#tpu.dimension_semantics<parallel>], iteration_bounds = array<i64: 1>, scalar_prefetch = 0 : i64, scratch_operands = 0 : i64, tpu.core_type = #tpu.core_type<tc>, window_params = [{transform_indices = @transform_0, window_bounds = array<i64: 10, 256>}, {pipeline_mode = #tpu.pipeline_mode<synchronous>, transform_indices = @transform_1, window_bounds = array<i64: 256, 10>}, {pipeline_mode = #tpu.pipeline_mode<synchronous>, transform_indices = @transform_2, window_bounds = array<i64: 256, 1>}, {pipeline_mode = #tpu.pipeline_mode<synchronous>, transform_indices = @transform_3, window_bounds = array<i64: 1, 256>}, {pipeline_mode = #tpu.pipeline_mode<synchronous>, transform_indices = @transform_4, window_bounds = array<i64: 1, 1>}, {transform_indices = @transform_5, window_bounds = array<i64: 1, 256>}]} {
    %c0 = arith.constant 0 : index
    %c0_0 = arith.constant 0 : index
    %0 = vector.load %arg2[%c0, %c0_0] : memref<256x10xf32, #tpu.memory_space<vmem>>, vector<256x10xf32>
    %c0_1 = arith.constant 0 : index
    %c0_2 = arith.constant 0 : index
    %1 = vector.load %arg1[%c0_1, %c0_2] : memref<10x256xf32, #tpu.memory_space<vmem>>, vector<10x256xf32>
    %cst = arith.constant dense<0.000000e+00> : vector<256x256xf32>
    %2 = tpu.matmul %0, %1, %cst {dimension_numbers = #tpu.dot_dimension_numbers<[1], [0], [0], [1], [0, 0, 1, 1], [], []>} : vector<256x10xf32>, vector<10x256xf32>, vector<256x256xf32> -> vector<256x256xf32>
    %c0_3 = arith.constant 0 : index
    %c0_4 = arith.constant 0 : index
    %3 = vector.load %arg3[%c0_3, %c0_4] : memref<256x1xf32, #tpu.memory_space<vmem>>, vector<256x1xf32>
    %4 = vector.broadcast %3 : vector<256x1xf32> to vector<256x256xf32>
    %5 = arith.addf %2, %4 : vector<256x256xf32>
    %6 = math.tanh %5 : vector<256x256xf32>
    %c0_5 = arith.constant 0 : index
    %c0_6 = arith.constant 0 : index
    %7 = vector.load %arg4[%c0_5, %c0_6] : memref<1x256xf32, #tpu.memory_space<vmem>>, vector<1x256xf32>
    %cst_7 = arith.constant dense<0.000000e+00> : vector<1x256xf32>
    %8 = tpu.matmul %7, %6, %cst_7 {dimension_numbers = #tpu.dot_dimension_numbers<[1], [0], [0], [1], [0, 0, 1, 1], [], []>} : vector<1x256xf32>, vector<256x256xf32>, vector<1x256xf32> -> vector<1x256xf32>
    %c0_8 = arith.constant 0 : index
    %c0_9 = arith.constant 0 : index
    %9 = vector.load %arg5[%c0_8, %c0_9] : memref<1x1xf32, #tpu.memory_space<vmem>>, vector<1x1xf32>
    %10 = vector.broadcast %9 : vector<1x1xf32> to vector<1x256xf32>
    %11 = arith.addf %8, %10 : vector<1x256xf32>
    %c0_10 = arith.constant 0 : index
    %c0_11 = arith.constant 0 : index
    %12 = vector.load %arg6[%c0_10, %c0_11] : memref<1x256xf32, #tpu.memory_space<vmem>>, vector<1x256xf32>
    tpu.vector_store %arg6[%c0_10, %c0_11], %11 {strides = array<i32>} : memref<1x256xf32, #tpu.memory_space<vmem>>, vector<1x256xf32>,
    return
  }
  func.func @transform_0(%arg0: i32) -> (i32, i32) {
    %c0_i32 = arith.constant 0 : i32
    %c0_i32_0 = arith.constant 0 : i32
    return %c0_i32, %arg0 : i32, i32
  }
  func.func @transform_1(%arg0: i32) -> (i32, i32) {
    %c0_i32 = arith.constant 0 : i32
    %c0_i32_0 = arith.constant 0 : i32
    %c0_i32_1 = arith.constant 0 : i32
    return %c0_i32, %c0_i32_0 : i32, i32
  }
  func.func @transform_2(%arg0: i32) -> (i32, i32) {
    %c0_i32 = arith.constant 0 : i32
    %c0_i32_0 = arith.constant 0 : i32
    %c0_i32_1 = arith.constant 0 : i32
    return %c0_i32, %c0_i32_0 : i32, i32
  }
  func.func @transform_3(%arg0: i32) -> (i32, i32) {
    %c0_i32 = arith.constant 0 : i32
    %c0_i32_0 = arith.constant 0 : i32
    %c0_i32_1 = arith.constant 0 : i32
    return %c0_i32, %c0_i32_0 : i32, i32
  }
  func.func @transform_4(%arg0: i32) -> (i32, i32) {
    %c0_i32 = arith.constant 0 : i32
    %c0_i32_0 = arith.constant 0 : i32
    %c0_i32_1 = arith.constant 0 : i32
    return %c0_i32, %c0_i32_0 : i32, i32
  }
  func.func @transform_5(%arg0: i32) -> (i32, i32) {
    %c0_i32 = arith.constant 0 : i32
    %c0_i32_0 = arith.constant 0 : i32
    return %c0_i32, %arg0 : i32, i32
  }
}

</mosaic_0001>

<llo_original>
// kernel: tpu_custom_call.1
$region0: #{tpu_custom_call.1}
  #allocation0 [shape = 'u32[]', space=smem, size = 0x4, offset = 0x4, fixed_abs, tag = 'smem constant byte address 0x4 - core index']
  #allocation1 [shape = 'u32[144,128]{1,0:T(1,128)}', space=vmem, size = 0x12000, scoped, tag = 'internal scratch']
  #allocation2 [shape = 'f32[1,1]{1,0:T(1,128)S(1)}', space=vmem, size = 0x200, scoped, tag = 'scoped memory for tpu_custom_call.1']
  %s0 = inlined_call_operand.vmem [shape: f32[10,256], index: 0, kind: input, shape index: {}]
  %s1 = inlined_call_operand.vmem [shape: f32[256,10], index: 1, kind: input, shape index: {}]
  %s2 = inlined_call_operand.vmem [shape: f32[256,1], index: 2, kind: input, shape index: {}]
  %s3 = inlined_call_operand.vmem [shape: f32[1,256], index: 3, kind: input, shape index: {}]
  %s4 = inlined_call_operand.<no memory space> [shape: f32[1,1], index: 4, kind: input, shape index: {}]
  %s5 = inlined_call_operand.hbm [shape: f32[1,256], index: 5, kind: output, shape index: {}]
  %s6 = sld [smem:[#allocation0]]
  $region30: #{tpu_custom_call.1} parent=0
    _
  %s8 = ssub.s32 1, %s6
  %s9 = scalar_select 0, %s8, %s6
  %v10 = vstv %s4
  %11 = vst [vmem:[#allocation2] sm:$0x1] %v10
  $region1: #{tpu_custom_call.1} parent=0
    #allocation3 [shape = 'u8[1024]{0}', space=vmem, size = 0x400, scoped, tag = 'output window, operand 0, single buffered']
    #allocation4 [shape = 's32[1]{0}', space=sflag, size = 0x4, scoped, tag = 'scoped memory for tpu_custom_call.1']
    %12 = vsyncpa [#allocation4], 0
    // Predicated region
    $region2: #{tpu_custom_call.1} parent=1 // pred_check
      _
    $region3: #{tpu_custom_call.1} parent=1 // pred_check_branch
      %14 = sbr.rel (0) target = $region5
    $region4: #{tpu_custom_call.1} parent=1 // pred_region
      _
    $region5: #{tpu_custom_call.1} parent=1 // pred_fallthru
      _
    // Predicated region
    $region6: #{tpu_custom_call.1} parent=1 // pred_check
      _
    $region7: #{tpu_custom_call.1} parent=1 // pred_check_branch
      %16 = sbr.rel (0) target = $region9
    $region8: #{tpu_custom_call.1} parent=1 // pred_region
      _
    $region9: #{tpu_custom_call.1} parent=1 // pred_fallthru
      _
    // Predicated region
    $region10: #{tpu_custom_call.1} parent=1 // pred_check
      _
    $region11: #{tpu_custom_call.1} parent=1 // pred_check_branch
      %18 = sbr.rel (0) target = $region13
    $region12: #{tpu_custom_call.1} parent=1 // pred_region
      _
    $region13: #{tpu_custom_call.1} parent=1 // pred_fallthru
      _
    // Predicated region
    $region14: #{tpu_custom_call.1} parent=1 // pred_check
      _
    $region15: #{tpu_custom_call.1} parent=1 // pred_check_branch
      %20 = sbr.rel (0) target = $region17
    $region16: #{tpu_custom_call.1} parent=1 // pred_region
      _
    $region17: #{tpu_custom_call.1} parent=1 // pred_fallthru
      _
    // Predicated region
    $region18: #{tpu_custom_call.1} parent=1 // pred_check
      _
    $region19: #{tpu_custom_call.1} parent=1 // pred_check_branch
      %22 = sbr.rel (0) target = $region21
    $region20: #{tpu_custom_call.1} parent=1 // pred_region
      _
    $region21: #{tpu_custom_call.1} parent=1 // pred_fallthru
      _
    %v23 = vld [vmem:[%s1] sm:$0xff]
    %v24 = vld [vmem:[%s1 + $0x8] sm:$0xff]
    %v25 = vld [vmem:[%s1 + $0x10] sm:$0xff]
    %v26 = vld [vmem:[%s1 + $0x18] sm:$0xff]
    %v27 = vld [vmem:[%s1 + $0x20] sm:$0xff]
    %v28 = vld [vmem:[%s1 + $0x28] sm:$0xff]
    %v29 = vld [vmem:[%s1 + $0x30] sm:$0xff]
    %v30 = vld [vmem:[%s1 + $0x38] sm:$0xff]
    %v31 = vld [vmem:[%s1 + $0x40] sm:$0xff]
    %v32 = vld [vmem:[%s1 + $0x48] sm:$0xff]
    %v33 = vld [vmem:[%s1 + $0x50] sm:$0xff]
    %v34 = vld [vmem:[%s1 + $0x58] sm:$0xff]
    %v35 = vld [vmem:[%s1 + $0x60] sm:$0xff]
    %v36 = vld [vmem:[%s1 + $0x68] sm:$0xff]
    %v37 = vld [vmem:[%s1 + $0x70] sm:$0xff]
    %v38 = vld [vmem:[%s1 + $0x78] sm:$0xff]
    %v39 = vld [vmem:[%s1 + $0x80] sm:$0xff]
    %v40 = vld [vmem:[%s1 + $0x88] sm:$0xff]
    %v41 = vld [vmem:[%s1 + $0x90] sm:$0xff]
    %v42 = vld [vmem:[%s1 + $0x98] sm:$0xff]
    %v43 = vld [vmem:[%s1 + $0xa0] sm:$0xff]
    %v44 = vld [vmem:[%s1 + $0xa8] sm:$0xff]
    %v45 = vld [vmem:[%s1 + $0xb0] sm:$0xff]
    %v46 = vld [vmem:[%s1 + $0xb8] sm:$0xff]
    %v47 = vld [vmem:[%s1 + $0xc0] sm:$0xff]
    %v48 = vld [vmem:[%s1 + $0xc8] sm:$0xff]
    %v49 = vld [vmem:[%s1 + $0xd0] sm:$0xff]
    %v50 = vld [vmem:[%s1 + $0xd8] sm:$0xff]
    %v51 = vld [vmem:[%s1 + $0xe0] sm:$0xff]
    %v52 = vld [vmem:[%s1 + $0xe8] sm:$0xff]
    %v53 = vld [vmem:[%s1 + $0xf0] sm:$0xff]
    %v54 = vld [vmem:[%s1 + $0xf8] sm:$0xff]
    %v55 = vld [vmem:[%s0] sm:$0xff]
    %v56 = vld [vmem:[%s0 + $0x8] sm:$0xff]
    %v57 = vld [vmem:[%s0 + $0x10] sm:$0x3]
    %v58 = vld [vmem:[%s0 + $0x18] sm:$0x3]
    %v59 = vld [vmem:[%s2] sm:$0xff]
    %v60 = vld [vmem:[%s2 + $0x8] sm:$0xff]
    %v61 = vld [vmem:[%s2 + $0x10] sm:$0xff]
    %v62 = vld [vmem:[%s2 + $0x18] sm:$0xff]
    %v63 = vld [vmem:[%s2 + $0x20] sm:$0xff]
    %v64 = vld [vmem:[%s2 + $0x28] sm:$0xff]
    %v65 = vld [vmem:[%s2 + $0x30] sm:$0xff]
    %v66 = vld [vmem:[%s2 + $0x38] sm:$0xff]
    %v67 = vld [vmem:[%s2 + $0x40] sm:$0xff]
    %v68 = vld [vmem:[%s2 + $0x48] sm:$0xff]
    %v69 = vld [vmem:[%s2 + $0x50] sm:$0xff]
    %v70 = vld [vmem:[%s2 + $0x58] sm:$0xff]
    %v71 = vld [vmem:[%s2 + $0x60] sm:$0xff]
    %v72 = vld [vmem:[%s2 + $0x68] sm:$0xff]
    %v73 = vld [vmem:[%s2 + $0x70] sm:$0xff]
    %v74 = vld [vmem:[%s2 + $0x78] sm:$0xff]
    %v75 = vld [vmem:[%s2 + $0x80] sm:$0xff]
    %v76 = vld [vmem:[%s2 + $0x88] sm:$0xff]
    %v77 = vld [vmem:[%s2 + $0x90] sm:$0xff]
    %v78 = vld [vmem:[%s2 + $0x98] sm:$0xff]
    %v79 = vld [vmem:[%s2 + $0xa0] sm:$0xff]
    %v80 = vld [vmem:[%s2 + $0xa8] sm:$0xff]
    %v81 = vld [vmem:[%s2 + $0xb0] sm:$0xff]
    %v82 = vld [vmem:[%s2 + $0xb8] sm:$0xff]
    %v83 = vld [vmem:[%s2 + $0xc0] sm:$0xff]
    %v84 = vld [vmem:[%s2 + $0xc8] sm:$0xff]
    %v85 = vld [vmem:[%s2 + $0xd0] sm:$0xff]
    %v86 = vld [vmem:[%s2 + $0xd8] sm:$0xff]
    %v87 = vld [vmem:[%s2 + $0xe0] sm:$0xff]
    %v88 = vld [vmem:[%s2 + $0xe8] sm:$0xff]
    %v89 = vld [vmem:[%s2 + $0xf0] sm:$0xff]
    %v90 = vld [vmem:[%s2 + $0xf8] sm:$0xff]
    %92 = vset.pattern.permute.xlu0 0
    %93 = vperm.xlu0 %92, %v59
    %v94 = vpop.permute.xlu0 %93
    %97 = vset.pattern.permute.xlu0 0
    %98 = vperm.xlu0 %97, %v60
    %v99 = vpop.permute.xlu0 %98
    %102 = vset.pattern.permute.xlu0 0
    %103 = vperm.xlu0 %102, %v61
    %v104 = vpop.permute.xlu0 %103
    %107 = vset.pattern.permute.xlu0 0
    %108 = vperm.xlu0 %107, %v62
    %v109 = vpop.permute.xlu0 %108
    %112 = vset.pattern.permute.xlu0 0
    %113 = vperm.xlu0 %112, %v63
    %v114 = vpop.permute.xlu0 %113
    %117 = vset.pattern.permute.xlu0 0
    %118 = vperm.xlu0 %117, %v64
    %v119 = vpop.permute.xlu0 %118
    %122 = vset.pattern.permute.xlu0 0
    %123 = vperm.xlu0 %122, %v65
    %v124 = vpop.permute.xlu0 %123
    %127 = vset.pattern.permute.xlu0 0
    %128 = vperm.xlu0 %127, %v66
    %v129 = vpop.permute.xlu0 %128
    %132 = vset.pattern.permute.xlu0 0
    %133 = vperm.xlu0 %132, %v67
    %v134 = vpop.permute.xlu0 %133
    %137 = vset.pattern.permute.xlu0 0
    %138 = vperm.xlu0 %137, %v68
    %v139 = vpop.permute.xlu0 %138
    %142 = vset.pattern.permute.xlu0 0
    %143 = vperm.xlu0 %142, %v69
    %v144 = vpop.permute.xlu0 %143
    %147 = vset.pattern.permute.xlu0 0
    %148 = vperm.xlu0 %147, %v70
    %v149 = vpop.permute.xlu0 %148
    %152 = vset.pattern.permute.xlu0 0
    %153 = vperm.xlu0 %152, %v71
    %v154 = vpop.permute.xlu0 %153
    %157 = vset.pattern.permute.xlu0 0
    %158 = vperm.xlu0 %157, %v72
    %v159 = vpop.permute.xlu0 %158
    %162 = vset.pattern.permute.xlu0 0
    %163 = vperm.xlu0 %162, %v73
    %v164 = vpop.permute.xlu0 %163
    %167 = vset.pattern.permute.xlu0 0
    %168 = vperm.xlu0 %167, %v74
    %v169 = vpop.permute.xlu0 %168
    %172 = vset.pattern.permute.xlu0 0
    %173 = vperm.xlu0 %172, %v75
    %v174 = vpop.permute.xlu0 %173
    %177 = vset.pattern.permute.xlu0 0
    %178 = vperm.xlu0 %177, %v76
    %v179 = vpop.permute.xlu0 %178
    %182 = vset.pattern.permute.xlu0 0
    %183 = vperm.xlu0 %182, %v77
    %v184 = vpop.permute.xlu0 %183
    %187 = vset.pattern.permute.xlu0 0
    %188 = vperm.xlu0 %187, %v78
    %v189 = vpop.permute.xlu0 %188
    %192 = vset.pattern.permute.xlu0 0
    %193 = vperm.xlu0 %192, %v79
    %v194 = vpop.permute.xlu0 %193
    %197 = vset.pattern.permute.xlu0 0
    %198 = vperm.xlu0 %197, %v80
    %v199 = vpop.permute.xlu0 %198
    %202 = vset.pattern.permute.xlu0 0
    %203 = vperm.xlu0 %202, %v81
    %v204 = vpop.permute.xlu0 %203
    %207 = vset.pattern.permute.xlu0 0
    %208 = vperm.xlu0 %207, %v82
    %v209 = vpop.permute.xlu0 %208
    %212 = vset.pattern.permute.xlu0 0
    %213 = vperm.xlu0 %212, %v83
    %v214 = vpop.permute.xlu0 %213
    %217 = vset.pattern.permute.xlu0 0
    %218 = vperm.xlu0 %217, %v84
    %v219 = vpop.permute.xlu0 %218
    %222 = vset.pattern.permute.xlu0 0
    %223 = vperm.xlu0 %222, %v85
    %v224 = vpop.permute.xlu0 %223
    %227 = vset.pattern.permute.xlu0 0
    %228 = vperm.xlu0 %227, %v86
    %v229 = vpop.permute.xlu0 %228
    %232 = vset.pattern.permute.xlu0 0
    %233 = vperm.xlu0 %232, %v87
    %v234 = vpop.permute.xlu0 %233
    %237 = vset.pattern.permute.xlu0 0
    %238 = vperm.xlu0 %237, %v88
    %v239 = vpop.permute.xlu0 %238
    %242 = vset.pattern.permute.xlu0 0
    %243 = vperm.xlu0 %242, %v89
    %v244 = vpop.permute.xlu0 %243
    %247 = vset.pattern.permute.xlu0 0
    %248 = vperm.xlu0 %247, %v90
    %v249 = vpop.permute.xlu0 %248
    %vm251 = vcmask 80896
    %v253 = vsel %vm251, %v23, 0
    %v256 = vsel %vm251, %v24, 0
    %v259 = vsel %vm251, %v25, 0
    %v262 = vsel %vm251, %v26, 0
    %v265 = vsel %vm251, %v27, 0
    %v268 = vsel %vm251, %v28, 0
    %v271 = vsel %vm251, %v29, 0
    %v274 = vsel %vm251, %v30, 0
    %v277 = vsel %vm251, %v31, 0
    %v280 = vsel %vm251, %v32, 0
    %v283 = vsel %vm251, %v33, 0
    %v286 = vsel %vm251, %v34, 0
    %v289 = vsel %vm251, %v35, 0
    %v292 = vsel %vm251, %v36, 0
    %v295 = vsel %vm251, %v37, 0
    %v298 = vsel %vm251, %v38, 0
    %v301 = vsel %vm251, %v39, 0
    %v304 = vsel %vm251, %v40, 0
    %v307 = vsel %vm251, %v41, 0
    %v310 = vsel %vm251, %v42, 0
    %v313 = vsel %vm251, %v43, 0
    %v316 = vsel %vm251, %v44, 0
    %v319 = vsel %vm251, %v45, 0
    %v322 = vsel %vm251, %v46, 0
    %v325 = vsel %vm251, %v47, 0
    %v328 = vsel %vm251, %v48, 0
    %v331 = vsel %vm251, %v49, 0
    %v334 = vsel %vm251, %v50, 0
    %v337 = vsel %vm251, %v51, 0
    %v340 = vsel %vm251, %v52, 0
    %v343 = vsel %vm251, %v53, 0
    %v346 = vsel %vm251, %v54, 0
    %vm348 = vcmask 1041408
    %v350 = vsel %vm348, %v57, 0
    %v353 = vsel %vm348, %v58, 0
    %355 = vmatprep.subr.mxu0 %v56
    %356 = vmatpush1.msra.mxu0 %v55
    %357 = vmatprep.subr.mxu0 %v353
    %358 = vmatpush1.msra.mxu0 %v350
    %359 = vmatprep.subr.mxu0 0.0
    %360 = vmatpush1.msra.mxu0 0.0
    %361 = vmatprep.subr.mxu0 0.0
    %362 = vmatpush1.msra.mxu0 0.0
    %363 = vmatprep.subr.mxu0 0.0
    %364 = vmatpush1.msra.mxu0 0.0
    %365 = vmatprep.subr.mxu0 0.0
    %366 = vmatpush1.msra.mxu0 0.0
    %367 = vmatprep.subr.mxu0 0.0
    %368 = vmatpush1.msra.mxu0 0.0
    %369 = vmatprep.subr.mxu0 0.0
    %370 = vmatpush1.msra.mxu0 0.0
    %371 = vmatprep.subr.mxu0 0.0
    %372 = vmatpush1.msra.mxu0 0.0
    %373 = vmatprep.subr.mxu0 0.0
    %374 = vmatpush1.msra.mxu0 0.0
    %375 = vmatprep.subr.mxu0 0.0
    %376 = vmatpush1.msra.mxu0 0.0
    %377 = vmatprep.subr.mxu0 0.0
    %378 = vmatpush1.msra.mxu0 0.0
    %379 = vmatprep.subr.mxu0 0.0
    %380 = vmatpush1.msra.mxu0 0.0
    %381 = vmatprep.subr.mxu0 0.0
    %382 = vmatpush1.msra.mxu0 0.0
    %383 = vmatprep.subr.mxu0 0.0
    %384 = vmatpush1.msra.mxu0 0.0
    %385 = vmatprep.subr.mxu0 0.0
    %386 = vmatpush1.msra.mxu0 0.0
    %387 = vmatprep.subr.mxu0 0.0
    %388 = vmatpush1.msra.mxu0 0.0
    %389 = vmatprep.subr.mxu0 0.0
    %390 = vmatpush1.msra.mxu0 0.0
    %391 = vmatprep.subr.mxu0 0.0
    %392 = vmatpush1.msra.mxu0 0.0
    %393 = vmatprep.subr.mxu0 0.0
    %394 = vmatpush1.msra.mxu0 0.0
    %395 = vmatprep.subr.mxu0 0.0
    %396 = vmatpush1.msra.mxu0 0.0
    %397 = vmatprep.subr.mxu0 0.0
    %398 = vmatpush1.msra.mxu0 0.0
    %399 = vmatprep.subr.mxu0 0.0
    %400 = vmatpush1.msra.mxu0 0.0
    %401 = vmatprep.subr.mxu0 0.0
    %402 = vmatpush1.msra.mxu0 0.0
    %403 = vmatprep.subr.mxu0 0.0
    %404 = vmatpush1.msra.mxu0 0.0
    %405 = vmatprep.subr.mxu0 0.0
    %406 = vmatpush1.msra.mxu0 0.0
    %407 = vmatprep.subr.mxu0 0.0
    %408 = vmatpush1.msra.mxu0 0.0
    %409 = vmatprep.subr.mxu0 0.0
    %410 = vmatpush1.msra.mxu0 0.0
    %411 = vmatprep.subr.mxu0 0.0
    %412 = vmatpush1.msra.mxu0 0.0
    %413 = vmatprep.subr.mxu0 0.0
    %414 = vmatpush1.msra.mxu0 0.0
    %415 = vmatprep.subr.mxu0 0.0
    %416 = vmatpush1.msra.mxu0 0.0
    %417 = vmatprep.subr.mxu0 0.0
    %418 = vmatpush1.msra.mxu0 0.0
    %419 = vmatprep.mubr.f32.mxu0 0.0
    %420 = vmatmul.mubr.f32.gmra.mrb[0].mxu0 %v253
    %v421 = vpop.f32.mrb[0].mxu0
    %v422 = vadd.f32 %v94, %v421
    %v423 = vpop.f32.mrb[0].mxu0
    %v424 = vadd.f32 %v94, %v423
    %425 = vmatprep.mubr.f32.mxu0 0.0
    %426 = vmatmul.mubr.f32.gmra.mrb[0].mxu0 %v256
    %v427 = vpop.f32.mrb[0].mxu0
    %v428 = vadd.f32 %v99, %v427
    %v429 = vpop.f32.mrb[0].mxu0
    %v430 = vadd.f32 %v99, %v429
    %431 = vmatprep.mubr.f32.mxu0 0.0
    %432 = vmatmul.mubr.f32.gmra.mrb[0].mxu0 %v259
    %v433 = vpop.f32.mrb[0].mxu0
    %v434 = vadd.f32 %v104, %v433
    %v435 = vpop.f32.mrb[0].mxu0
    %v436 = vadd.f32 %v104, %v435
    %437 = vmatprep.mubr.f32.mxu0 0.0
    %438 = vmatmul.mubr.f32.gmra.mrb[0].mxu0 %v262
    %v439 = vpop.f32.mrb[0].mxu0
    %v440 = vadd.f32 %v109, %v439
    %v441 = vpop.f32.mrb[0].mxu0
    %v442 = vadd.f32 %v109, %v441
    %443 = vmatprep.mubr.f32.mxu0 0.0
    %444 = vmatmul.mubr.f32.gmra.mrb[0].mxu0 %v265
    %v445 = vpop.f32.mrb[0].mxu0
    %v446 = vadd.f32 %v114, %v445
    %v447 = vpop.f32.mrb[0].mxu0
    %v448 = vadd.f32 %v114, %v447
    %449 = vmatprep.mubr.f32.mxu0 0.0
    %450 = vmatmul.mubr.f32.gmra.mrb[0].mxu0 %v268
    %v451 = vpop.f32.mrb[0].mxu0
    %v452 = vadd.f32 %v119, %v451
    %v453 = vpop.f32.mrb[0].mxu0
    %v454 = vadd.f32 %v119, %v453
    %455 = vmatprep.mubr.f32.mxu0 0.0
    %456 = vmatmul.mubr.f32.gmra.mrb[0].mxu0 %v271
    %v457 = vpop.f32.mrb[0].mxu0
    %v458 = vadd.f32 %v124, %v457
    %v459 = vpop.f32.mrb[0].mxu0
    %v460 = vadd.f32 %v124, %v459
    %461 = vmatprep.mubr.f32.mxu0 0.0
    %462 = vmatmul.mubr.f32.gmra.mrb[0].mxu0 %v274
    %v463 = vpop.f32.mrb[0].mxu0
    %v464 = vadd.f32 %v129, %v463
    %v465 = vpop.f32.mrb[0].mxu0
    %v466 = vadd.f32 %v129, %v465
    %467 = vmatprep.mubr.f32.mxu0 0.0
    %468 = vmatmul.mubr.f32.gmra.mrb[0].mxu0 %v277
    %v469 = vpop.f32.mrb[0].mxu0
    %v470 = vadd.f32 %v134, %v469
    %v471 = vpop.f32.mrb[0].mxu0
    %v472 = vadd.f32 %v134, %v471
    %473 = vmatprep.mubr.f32.mxu0 0.0
    %474 = vmatmul.mubr.f32.gmra.mrb[0].mxu0 %v280
    %v475 = vpop.f32.mrb[0].mxu0
    %v476 = vadd.f32 %v139, %v475
    %v477 = vpop.f32.mrb[0].mxu0
    %v478 = vadd.f32 %v139, %v477
    %479 = vmatprep.mubr.f32.mxu0 0.0
    %480 = vmatmul.mubr.f32.gmra.mrb[0].mxu0 %v283
    %v481 = vpop.f32.mrb[0].mxu0
    %v482 = vadd.f32 %v144, %v481
    %v483 = vpop.f32.mrb[0].mxu0
    %v484 = vadd.f32 %v144, %v483
    %485 = vmatprep.mubr.f32.mxu0 0.0
    %486 = vmatmul.mubr.f32.gmra.mrb[0].mxu0 %v286
    %v487 = vpop.f32.mrb[0].mxu0
    %v488 = vadd.f32 %v149, %v487
    %v489 = vpop.f32.mrb[0].mxu0
    %v490 = vadd.f32 %v149, %v489
    %491 = vmatprep.mubr.f32.mxu0 0.0
    %492 = vmatmul.mubr.f32.gmra.mrb[0].mxu0 %v289
    %v493 = vpop.f32.mrb[0].mxu0
    %v494 = vadd.f32 %v154, %v493
    %v495 = vpop.f32.mrb[0].mxu0
    %v496 = vadd.f32 %v154, %v495
    %497 = vmatprep.mubr.f32.mxu0 0.0
    %498 = vmatmul.mubr.f32.gmra.mrb[0].mxu0 %v292
    %v499 = vpop.f32.mrb[0].mxu0
    %v500 = vadd.f32 %v159, %v499
    %v501 = vpop.f32.mrb[0].mxu0
    %v502 = vadd.f32 %v159, %v501
    %503 = vmatprep.mubr.f32.mxu0 0.0
    %504 = vmatmul.mubr.f32.gmra.mrb[0].mxu0 %v295
    %v505 = vpop.f32.mrb[0].mxu0
    %v506 = vadd.f32 %v164, %v505
    %v507 = vpop.f32.mrb[0].mxu0
    %v508 = vadd.f32 %v164, %v507
    %509 = vmatprep.mubr.f32.mxu0 0.0
    %510 = vmatmul.mubr.f32.gmra.mrb[0].mxu0 %v298
    %v511 = vpop.f32.mrb[0].mxu0
    %v512 = vadd.f32 %v169, %v511
    %v513 = vpop.f32.mrb[0].mxu0
    %v514 = vadd.f32 %v169, %v513
    %515 = vmatprep.mubr.f32.mxu0 0.0
    %516 = vmatmul.mubr.f32.gmra.mrb[0].mxu0 %v301
    %v517 = vpop.f32.mrb[0].mxu0
    %v518 = vadd.f32 %v174, %v517
    %v519 = vpop.f32.mrb[0].mxu0
    %v520 = vadd.f32 %v174, %v519
    %521 = vmatprep.mubr.f32.mxu0 0.0
    %522 = vmatmul.mubr.f32.gmra.mrb[0].mxu0 %v304
    %v523 = vpop.f32.mrb[0].mxu0
    %v524 = vadd.f32 %v179, %v523
    %v525 = vpop.f32.mrb[0].mxu0
    %v526 = vadd.f32 %v179, %v525
    %527 = vmatprep.mubr.f32.mxu0 0.0
    %528 = vmatmul.mubr.f32.gmra.mrb[0].mxu0 %v307
    %v529 = vpop.f32.mrb[0].mxu0
    %v530 = vadd.f32 %v184, %v529
    %v531 = vpop.f32.mrb[0].mxu0
    %v532 = vadd.f32 %v184, %v531
    %533 = vmatprep.mubr.f32.mxu0 0.0
    %534 = vmatmul.mubr.f32.gmra.mrb[0].mxu0 %v310
    %v535 = vpop.f32.mrb[0].mxu0
    %v536 = vadd.f32 %v189, %v535
    %v537 = vpop.f32.mrb[0].mxu0
    %v538 = vadd.f32 %v189, %v537
    %539 = vmatprep.mubr.f32.mxu0 0.0
    %540 = vmatmul.mubr.f32.gmra.mrb[0].mxu0 %v313
    %v541 = vpop.f32.mrb[0].mxu0
    %v542 = vadd.f32 %v194, %v541
    %v543 = vpop.f32.mrb[0].mxu0
    %v544 = vadd.f32 %v194, %v543
    %545 = vmatprep.mubr.f32.mxu0 0.0
    %546 = vmatmul.mubr.f32.gmra.mrb[0].mxu0 %v316
    %v547 = vpop.f32.mrb[0].mxu0
    %v548 = vadd.f32 %v199, %v547
    %v549 = vpop.f32.mrb[0].mxu0
    %v550 = vadd.f32 %v199, %v549
    %551 = vmatprep.mubr.f32.mxu0 0.0
    %552 = vmatmul.mubr.f32.gmra.mrb[0].mxu0 %v319
    %v553 = vpop.f32.mrb[0].mxu0
    %v554 = vadd.f32 %v204, %v553
    %v555 = vpop.f32.mrb[0].mxu0
    %v556 = vadd.f32 %v204, %v555
    %557 = vmatprep.mubr.f32.mxu0 0.0
    %558 = vmatmul.mubr.f32.gmra.mrb[0].mxu0 %v322
    %v559 = vpop.f32.mrb[0].mxu0
    %v560 = vadd.f32 %v209, %v559
    %v561 = vpop.f32.mrb[0].mxu0
    %v562 = vadd.f32 %v209, %v561
    %563 = vmatprep.mubr.f32.mxu0 0.0
    %564 = vmatmul.mubr.f32.gmra.mrb[0].mxu0 %v325
    %v565 = vpop.f32.mrb[0].mxu0
    %v566 = vadd.f32 %v214, %v565
    %v567 = vpop.f32.mrb[0].mxu0
    %v568 = vadd.f32 %v214, %v567
    %569 = vmatprep.mubr.f32.mxu0 0.0
    %570 = vmatmul.mubr.f32.gmra.mrb[0].mxu0 %v328
    %v571 = vpop.f32.mrb[0].mxu0
    %v572 = vadd.f32 %v219, %v571
    %v573 = vpop.f32.mrb[0].mxu0
    %v574 = vadd.f32 %v219, %v573
    %575 = vmatprep.mubr.f32.mxu0 0.0
    %576 = vmatmul.mubr.f32.gmra.mrb[0].mxu0 %v331
    %v577 = vpop.f32.mrb[0].mxu0
    %v578 = vadd.f32 %v224, %v577
    %v579 = vpop.f32.mrb[0].mxu0
    %v580 = vadd.f32 %v224, %v579
    %581 = vmatprep.mubr.f32.mxu0 0.0
    %582 = vmatmul.mubr.f32.gmra.mrb[0].mxu0 %v334
    %v583 = vpop.f32.mrb[0].mxu0
    %v584 = vadd.f32 %v229, %v583
    %v585 = vpop.f32.mrb[0].mxu0
    %v586 = vadd.f32 %v229, %v585
    %587 = vmatprep.mubr.f32.mxu0 0.0
    %588 = vmatmul.mubr.f32.gmra.mrb[0].mxu0 %v337
    %v589 = vpop.f32.mrb[0].mxu0
    %v590 = vadd.f32 %v234, %v589
    %v591 = vpop.f32.mrb[0].mxu0
    %v592 = vadd.f32 %v234, %v591
    %593 = vmatprep.mubr.f32.mxu0 0.0
    %594 = vmatmul.mubr.f32.gmra.mrb[0].mxu0 %v340
    %v595 = vpop.f32.mrb[0].mxu0
    %v596 = vadd.f32 %v239, %v595
    %v597 = vpop.f32.mrb[0].mxu0
    %v598 = vadd.f32 %v239, %v597
    %599 = vmatprep.mubr.f32.mxu0 0.0
    %600 = vmatmul.mubr.f32.gmra.mrb[0].mxu0 %v343
    %v601 = vpop.f32.mrb[0].mxu0
    %v602 = vadd.f32 %v244, %v601
    %v603 = vpop.f32.mrb[0].mxu0
    %v604 = vadd.f32 %v244, %v603
    %605 = vmatprep.mubr.f32.mxu0 0.0
    %606 = vmatmul.mubr.f32.gmra.mrb[0].mxu0 %v346
    %v607 = vpop.f32.mrb[0].mxu0
    %v608 = vadd.f32 %v249, %v607
    %v609 = vpop.f32.mrb[0].mxu0
    %v610 = vadd.f32 %v249, %v609
    %611 = vdwg.mxu0
    %v612 = vtanh.pop %v422
    %v613 = vtanh.pop %v424
    %v614 = vtanh.pop %v428
    %v615 = vtanh.pop %v430
    %v616 = vtanh.pop %v434
    %v617 = vtanh.pop %v436
    %v618 = vtanh.pop %v440
    %v619 = vtanh.pop %v442
    %v620 = vtanh.pop %v446
    %v621 = vtanh.pop %v448
    %v622 = vtanh.pop %v452
    %v623 = vtanh.pop %v454
    %v624 = vtanh.pop %v458
    %v625 = vtanh.pop %v460
    %v626 = vtanh.pop %v464
    %v627 = vtanh.pop %v466
    %v628 = vtanh.pop %v470
    %v629 = vtanh.pop %v472
    %v630 = vtanh.pop %v476
    %v631 = vtanh.pop %v478
    %v632 = vtanh.pop %v482
    %v633 = vtanh.pop %v484
    %v634 = vtanh.pop %v488
    %v635 = vtanh.pop %v490
    %v636 = vtanh.pop %v494
    %v637 = vtanh.pop %v496
    %v638 = vtanh.pop %v500
    %v639 = vtanh.pop %v502
    %v640 = vtanh.pop %v506
    %v641 = vtanh.pop %v508
    %v642 = vtanh.pop %v512
    %v643 = vtanh.pop %v514
    %v644 = vtanh.pop %v518
    %v645 = vtanh.pop %v520
    %v646 = vtanh.pop %v524
    %v647 = vtanh.pop %v526
    %v648 = vtanh.pop %v530
    %v649 = vtanh.pop %v532
    %v650 = vtanh.pop %v536
    %v651 = vtanh.pop %v538
    %v652 = vtanh.pop %v542
    %v653 = vtanh.pop %v544
    %v654 = vtanh.pop %v548
    %v655 = vtanh.pop %v550
    %v656 = vtanh.pop %v554
    %v657 = vtanh.pop %v556
    %v658 = vtanh.pop %v560
    %v659 = vtanh.pop %v562
    %v660 = vtanh.pop %v566
    %v661 = vtanh.pop %v568
    %v662 = vtanh.pop %v572
    %v663 = vtanh.pop %v574
    %v664 = vtanh.pop %v578
    %v665 = vtanh.pop %v580
    %v666 = vtanh.pop %v584
    %v667 = vtanh.pop %v586
    %v668 = vtanh.pop %v590
    %v669 = vtanh.pop %v592
    %v670 = vtanh.pop %v596
    %v671 = vtanh.pop %v598
    %v672 = vtanh.pop %v602
    %v673 = vtanh.pop %v604
    %v674 = vtanh.pop %v608
    %v675 = vtanh.pop %v610
    %v676 = vld [vmem:[%s3] sm:$0x3]
    %v677 = vld [vmem:[#allocation2] sm:$0x1]
    %679 = vset.pattern.permute.xlu0 0
    %680 = vperm.xlu0 %679, %v677
    %v681 = vpop.permute.xlu0 %680
    %v683 = vlaneseq
    %v684 = vshrl.u32 %v683, 7
    %v685 = vsub.s32 0, %v684
    %v686 = vrot.slane %v681, %v685
    %v688 = vlaneseq
    %v689 = vshrl.u32 %v688, 7
    %v690 = vsub.s32 0, %v689
    %v691 = vrot.slane %v676, %v690
    %v692 = vlaneseq
    %v693 = vshrl.u32 %v692, 7
    %v694 = vsub.s32 1, %v693
    %v695 = vrot.slane %v676, %v694
    %698 = vmatprep.subr.mxu0 %v613
    %699 = vmatpush1.msra.mxu0 %v612
    %700 = vmatprep.subr.mxu0 %v615
    %701 = vmatpush1.msra.mxu0 %v614
    %702 = vmatprep.subr.mxu0 %v617
    %703 = vmatpush1.msra.mxu0 %v616
    %704 = vmatprep.subr.mxu0 %v619
    %705 = vmatpush1.msra.mxu0 %v618
    %706 = vmatprep.subr.mxu0 %v621
    %707 = vmatpush1.msra.mxu0 %v620
    %708 = vmatprep.subr.mxu0 %v623
    %709 = vmatpush1.msra.mxu0 %v622
    %710 = vmatprep.subr.mxu0 %v625
    %711 = vmatpush1.msra.mxu0 %v624
    %712 = vmatprep.subr.mxu0 %v627
    %713 = vmatpush1.msra.mxu0 %v626
    %714 = vmatprep.subr.mxu0 %v629
    %715 = vmatpush1.msra.mxu0 %v628
    %716 = vmatprep.subr.mxu0 %v631
    %717 = vmatpush1.msra.mxu0 %v630
    %718 = vmatprep.subr.mxu0 %v633
    %719 = vmatpush1.msra.mxu0 %v632
    %720 = vmatprep.subr.mxu0 %v635
    %721 = vmatpush1.msra.mxu0 %v634
    %722 = vmatprep.subr.mxu0 %v637
    %723 = vmatpush1.msra.mxu0 %v636
    %724 = vmatprep.subr.mxu0 %v639
    %725 = vmatpush1.msra.mxu0 %v638
    %726 = vmatprep.subr.mxu0 %v641
    %727 = vmatpush1.msra.mxu0 %v640
    %728 = vmatprep.subr.mxu0 %v643
    %729 = vmatpush1.msra.mxu0 %v642
    %730 = vmatprep.subr.mxu0 %v645
    %731 = vmatpush1.msra.mxu0 %v644
    %732 = vmatprep.subr.mxu0 %v647
    %733 = vmatpush1.msra.mxu0 %v646
    %734 = vmatprep.subr.mxu0 %v649
    %735 = vmatpush1.msra.mxu0 %v648
    %736 = vmatprep.subr.mxu0 %v651
    %737 = vmatpush1.msra.mxu0 %v650
    %738 = vmatprep.subr.mxu0 %v653
    %739 = vmatpush1.msra.mxu0 %v652
    %740 = vmatprep.subr.mxu0 %v655
    %741 = vmatpush1.msra.mxu0 %v654
    %742 = vmatprep.subr.mxu0 %v657
    %743 = vmatpush1.msra.mxu0 %v656
    %744 = vmatprep.subr.mxu0 %v659
    %745 = vmatpush1.msra.mxu0 %v658
    %746 = vmatprep.subr.mxu0 %v661
    %747 = vmatpush1.msra.mxu0 %v660
    %748 = vmatprep.subr.mxu0 %v663
    %749 = vmatpush1.msra.mxu0 %v662
    %750 = vmatprep.subr.mxu0 %v665
    %751 = vmatpush1.msra.mxu0 %v664
    %752 = vmatprep.subr.mxu0 %v667
    %753 = vmatpush1.msra.mxu0 %v666
    %754 = vmatprep.subr.mxu0 %v669
    %755 = vmatpush1.msra.mxu0 %v668
    %756 = vmatprep.subr.mxu0 %v671
    %757 = vmatpush1.msra.mxu0 %v670
    %758 = vmatprep.subr.mxu0 %v673
    %759 = vmatpush1.msra.mxu0 %v672
    %760 = vmatprep.subr.mxu0 %v675
    %761 = vmatpush1.msra.mxu0 %v674
    %762 = vmatprep.mubr.f32.mxu0 %v695
    %763 = vmatmul.mubr.f32.gmra.mrb[0].mxu0 %v691
    %v764 = vpop.f32.mrb[0].mxu0
    %v765 = vadd.f32 %v686, %v764
    %v766 = vpop.f32.mrb[0].mxu0
    %v767 = vadd.f32 %v686, %v766
    %768 = vdwg.mxu0
    %v771 = vcombine.low %v765, %v767
    %v773 = vunpack.c.l.s4 1966171168
    %v774 = vunpack.c.0.s8 %v773
    %v775 = vlaneseq
    %v776 = vshrl.u32 %v775, 7
    %v777 = vsub.s32 %v774, %v776
    %v778 = vrot.slane %v771, %v777
    %v780 = vunpack.c.l.s4 1966171168
    %v781 = vunpack.c.0.s8 %v780
    %v782 = vlaneseq
    %v783 = vshrl.u32 %v782, 7
    %v784 = vsub.s32 %v781, %v783
    %v785 = vrot.slane %v778, %v784
    %v787 = vlaneseq
    %vm788 = vcmp.ge.s32.totalorder %v787, 0
    %vm789 = vcmp.lt.s32.totalorder %v787, 256
    %vm790 = vmand %vm788, %vm789
    %791 = vst.msk [vmem:[#allocation3] sm:$0x3] %vm790, %v785
    // Predicated region
    $region22: #{tpu_custom_call.1} parent=1 // pred_check
      _
    $region23: #{tpu_custom_call.1} parent=1 // pred_check_branch
      %793 = sbr.rel (0) target = $region25
    $region24: #{tpu_custom_call.1} parent=1 // pred_region
      %s795 = ssub.s32 32, 32
      %796 = vsyncadd [#allocation4], %s795
      %s798 = sshll.u32 [#allocation3], 4
      %s799 = int_to_ptr.vmem [resolvable:$true] %s798
      %801 = dma.vmem_to_hbm [thread:$0]  %s799, 32, %s5, [#allocation4]
    $region25: #{tpu_custom_call.1} parent=1 // pred_fallthru
      _
    // Predicated region
    $region26: #{tpu_custom_call.1} parent=1 // pred_check
      _
    $region27: #{tpu_custom_call.1} parent=1 // pred_check_branch
      %803 = sbr.rel (0) target = $region29
    $region28: #{tpu_custom_call.1} parent=1 // pred_region
      %804 = dma.done [#allocation4], 32
    $region29: #{tpu_custom_call.1} parent=1 // pred_fallthru
      _
    %805 = vsyncpa [#allocation4], 1

</llo_original>
